<compile_context>
chip_gen: v7x
topology: tpu7x:2x2x1
jax: 0.10.0
libtpu: 0.0.40
codegen_flags: <defaults>
</compile_context>

<pallas_src>
import functools
import math

import jax
import jax.numpy as jnp
from jax.experimental import pallas as pl
from jax.experimental.pallas import tpu as pltpu


def _round_up(x, m):
    return ((x + m - 1) // m) * m


def mdn_kernel(x_ref, w_ref, b_ref, out_ref, *, num_gaussians, gxo):
    """Fused MDN forward: one matmul, lane-masked epilogue, one dense store.

    Output slab columns: [0, G) -> pi (softmax over G), [G, G+G*O) -> sigma
    (exp), [G+G*O, G+2*G*O) -> mu (identity), remaining columns -> zero-ish pad
    (discarded by the wrapper).
    """
    # Single MXU push for all three heads (bf16 inputs, f32 accumulate).
    y = jnp.dot(x_ref[...], w_ref[...],
                preferred_element_type=jnp.float32) + b_ref[...]

    col = jax.lax.broadcasted_iota(jnp.int32, y.shape, 1)
    is_pi = col < num_gaussians
    is_sigma = jnp.logical_and(col >= num_gaussians, col < num_gaussians + gxo)

    # Row max over the pi columns (softmax stabilization).
    m = jnp.max(jnp.where(is_pi, y, -jnp.inf), axis=1, keepdims=True)

    # Single full-slab exp (EUP has exactly one VLIW slot): pi columns get
    # exp(y - m), sigma columns exp(y), everything else exp(0) = 1 (finite,
    # selected away below).
    e_all = jnp.exp(jnp.where(is_pi, y - m, jnp.where(is_sigma, y, 0.0)))

    # Softmax over the pi columns with an exact f32 reciprocal (one per row).
    e_pi = jnp.where(is_pi, e_all, 0.0)
    denom = jnp.sum(e_pi, axis=1, keepdims=True)
    pi_vals = e_pi * (1.0 / denom)

    out_ref[...] = jnp.where(is_pi, pi_vals, jnp.where(is_sigma, e_all, y))


def mdn_forward(x, params, *, block_b=2048):
    """Run the MDN forward pass. x: (B, D_in) float32.

    Returns (pi, sigma, mu) with shapes (B, G), (B, G, O), (B, G, O), float32.
    """
    (w_pi, b_pi, w_sig, b_sig, w_mu, b_mu, G, O) = params
    B, D = x.shape
    GO = G * O
    w_total = G + 2 * GO
    w_pad = _round_up(w_total, 128)

    # Fuse the three heads into one (D, w_pad) weight / (1, w_pad) bias.
    # Weights and activations feed the MXU as bf16 (native on v6e/v7x, halves
    # HBM read bytes); bias and accumulation stay f32.
    w_fused = jnp.concatenate([w_pi, w_sig, w_mu], axis=1)
    b_fused = jnp.concatenate([b_pi, b_sig, b_mu], axis=1)
    w_fused = jnp.pad(w_fused, ((0, 0), (0, w_pad - w_total))).astype(jnp.bfloat16)
    b_fused = jnp.pad(b_fused, ((0, 0), (0, w_pad - w_total)))
    x_bf16 = x.astype(jnp.bfloat16)

    # Batch tile: multiple of 8 sublanes.  Large tiles amortize per-step grid
    # overhead; cap so the grid keeps >=4 steps for v7x's two TensorCores.
    if B <= 8:
        bb = B
    else:
        bb = max(8, min(block_b, _round_up(pl.cdiv(B, 4), 8)))
    grid = (pl.cdiv(B, bb),)

    cost = pl.CostEstimate(
        flops=2 * B * D * w_total,
        transcendentals=B * w_pad + B,               # one slab exp + row recip
        bytes_accessed=(2 * B * D                    # x (bf16)
                        + 2 * D * w_pad              # fused W (bf16)
                        + 4 * w_pad                  # fused bias (f32)
                        + 4 * B * w_pad),            # output slab (f32)
    )

    out = pl.pallas_call(
        functools.partial(mdn_kernel, num_gaussians=G, gxo=GO),
        out_shape=jax.ShapeDtypeStruct((B, w_pad), jnp.float32),
        grid=grid,
        in_specs=[
            pl.BlockSpec((bb, D), lambda i: (i, 0)),      # x: tiled over batch
            pl.BlockSpec((D, w_pad), lambda i: (0, 0)),   # fused W: resident
            pl.BlockSpec((1, w_pad), lambda i: (0, 0)),   # fused b: resident
        ],
        out_specs=pl.BlockSpec((bb, w_pad), lambda i: (i, 0)),  # lane-dense slab
        compiler_params=pltpu.CompilerParams(
            dimension_semantics=("parallel",),
            vmem_limit_bytes=48 << 20,   # headroom inside v7x's 64 MiB VMEM
        ),
        cost_estimate=cost,
    )(x_bf16, w_fused, b_fused)

    # Cheap wrapper-side slicing/reshaping (kept out of the kernel so the
    # kernel's last dim stays 128-lane dense; do NOT put O on the lane axis).
    pi = out[:, :G]
    sigma = out[:, G:G + GO].reshape(B, G, O)
    mu = out[:, G + GO:G + 2 * GO].reshape(B, G, O)
    return pi, sigma, mu


def init_mdn_params(key, in_features, out_features, num_gaussians):
    """Deterministic init mimicking nn.Linear default (uniform +-1/sqrt(fan_in))."""
    bound = 1.0 / math.sqrt(in_features)
    k = jax.random.split(key, 6)
    G, O, D = num_gaussians, out_features, in_features

    def u(kk, shape):
        return jax.random.uniform(kk, shape, jnp.float32, -bound, bound)

    w_pi = u(k[0], (D, G))
    b_pi = u(k[1], (1, G))
    w_sig = u(k[2], (D, G * O))
    b_sig = u(k[3], (1, G * O))
    w_mu = u(k[4], (D, G * O))
    b_mu = u(k[5], (1, G * O))
    return (w_pi, b_pi, w_sig, b_sig, w_mu, b_mu, G, O)


def mdn_reference(x, params, *, bf16_inputs=False):
    """Pure-JAX reference.

    bf16_inputs=True applies the same bf16 rounding to x / W that the kernel
    uses (f32 accumulation), so the comparison isolates kernel bugs from
    matmul-dtype rounding.
    """
    (w_pi, b_pi, w_sig, b_sig, w_mu, b_mu, G, O) = params
    B = x.shape[0]

    def prep(a):
        if bf16_inputs:
            return a.astype(jnp.bfloat16).astype(jnp.float32)
        return a

    xr = prep(x)
    logits = xr @ prep(w_pi) + b_pi
    pi = jax.nn.softmax(logits, axis=1)
    sigma = jnp.exp(xr @ prep(w_sig) + b_sig).reshape(B, G, O)
    mu = (xr @ prep(w_mu) + b_mu).reshape(B, G, O)
    return pi, sigma, mu


if __name__ == "__main__":
    # Small shapes consistent with the module: B x D_in minibatch.
    B, in_features, out_features, num_gaussians = 8, 32, 4, 5

    key = jax.random.PRNGKey(0)
    k_x, k_p = jax.random.split(key)
    x = jax.random.normal(k_x, (B, in_features), jnp.float32)
    params = init_mdn_params(k_p, in_features, out_features, num_gaussians)

    pi, sigma, mu = mdn_forward(x, params)
    jax.block_until_ready((pi, sigma, mu))

    assert pi.shape == (B, num_gaussians)
    assert sigma.shape == (B, num_gaussians, out_features)
    assert mu.shape == (B, num_gaussians, out_features)

    # Tight check: reference with the same bf16 input rounding as the kernel.
    pi_m, sigma_m, mu_m = mdn_reference(x, params, bf16_inputs=True)
    assert jnp.allclose(pi, pi_m, atol=1e-4, rtol=1e-3)
    assert jnp.allclose(sigma, sigma_m, atol=1e-4, rtol=1e-3)
    assert jnp.allclose(mu, mu_m, atol=1e-4, rtol=1e-3)

    # Loose check vs. full-f32 PyTorch semantics (bf16 matmul rounding ~1e-3).
    pi_r, sigma_r, mu_r = mdn_reference(x, params, bf16_inputs=False)
    assert jnp.allclose(pi, pi_r, atol=3e-2, rtol=3e-2)
    assert jnp.allclose(sigma, sigma_r, atol=3e-2, rtol=3e-2)
    assert jnp.allclose(mu, mu_r, atol=3e-2, rtol=3e-2)

    print("KERNEL_OK")
</pallas_src>

<mosaic_0001>
module attributes {stable_mosaic.version = 11 : i64} {
  func.func @mdn_kernel(%arg0: i32, %arg1: memref<8x32xbf16, #tpu.memory_space<vmem>>, %arg2: memref<32x128xbf16, #tpu.memory_space<vmem>>, %arg3: memref<1x128xf32, #tpu.memory_space<vmem>>, %arg4: memref<8x128xf32, #tpu.memory_space<vmem>>) attributes {dimension_semantics = [#tpu.dimension_semantics<parallel>], iteration_bounds = array<i64: 1>, scalar_prefetch = 0 : i64, scratch_operands = 0 : i64, tpu.core_type = #tpu.core_type<tc>, window_params = [{transform_indices = @transform_0, window_bounds = array<i64: 8, 32>}, {pipeline_mode = #tpu.pipeline_mode<synchronous>, transform_indices = @transform_1, window_bounds = array<i64: 32, 128>}, {pipeline_mode = #tpu.pipeline_mode<synchronous>, transform_indices = @transform_2, window_bounds = array<i64: 1, 128>}, {transform_indices = @transform_3, window_bounds = array<i64: 8, 128>}]} {
    %c0 = arith.constant 0 : index
    %c0_0 = arith.constant 0 : index
    %0 = vector.load %arg1[%c0, %c0_0] : memref<8x32xbf16, #tpu.memory_space<vmem>>, vector<8x32xbf16>
    %c0_1 = arith.constant 0 : index
    %c0_2 = arith.constant 0 : index
    %1 = vector.load %arg2[%c0_1, %c0_2] : memref<32x128xbf16, #tpu.memory_space<vmem>>, vector<32x128xbf16>
    %cst = arith.constant dense<0.000000e+00> : vector<8x128xf32>
    %2 = tpu.matmul %0, %1, %cst {dimension_numbers = #tpu.dot_dimension_numbers<[1], [0], [0], [1], [0, 0, 1, 1], [], []>} : vector<8x32xbf16>, vector<32x128xbf16>, vector<8x128xf32> -> vector<8x128xf32>
    %c0_3 = arith.constant 0 : index
    %c0_4 = arith.constant 0 : index
    %3 = vector.load %arg3[%c0_3, %c0_4] : memref<1x128xf32, #tpu.memory_space<vmem>>, vector<1x128xf32>
    %4 = vector.broadcast %3 : vector<1x128xf32> to vector<8x128xf32>
    %5 = arith.addf %2, %4 : vector<8x128xf32>
    %6 = tpu.iota {dimensions = array<i32: 1>} : vector<8x128xi32>
    %c5_i32 = arith.constant 5 : i32
    %7 = vector.broadcast %c5_i32 : i32 to vector<8x128xi32>
    %8 = arith.cmpi slt, %6, %7 : vector<8x128xi32>
    %c5_i32_5 = arith.constant 5 : i32
    %9 = vector.broadcast %c5_i32_5 : i32 to vector<8x128xi32>
    %10 = arith.cmpi sge, %6, %9 : vector<8x128xi32>
    %c25_i32 = arith.constant 25 : i32
    %11 = vector.broadcast %c25_i32 : i32 to vector<8x128xi32>
    %12 = arith.cmpi slt, %6, %11 : vector<8x128xi32>
    %13 = arith.andi %10, %12 : vector<8x128xi1>
    %cst_6 = arith.constant 0xFF800000 : f32
    %14 = vector.broadcast %cst_6 : f32 to vector<8x128xf32>
    %15 = arith.select %8, %5, %14 : vector<8x128xi1>, vector<8x128xf32>
    %cst_7 = arith.constant dense<0xFF800000> : vector<8xf32>
    %16 = vector.multi_reduction <maximumf>, %15, %cst_7 [1] : vector<8x128xf32> to vector<8xf32>
    %17 = vector.shape_cast %16 : vector<8xf32> to vector<8x1xf32>
    %18 = vector.broadcast %17 : vector<8x1xf32> to vector<8x128xf32>
    %19 = arith.subf %5, %18 : vector<8x128xf32>
    %cst_8 = arith.constant 0.000000e+00 : f32
    %20 = vector.broadcast %cst_8 : f32 to vector<8x128xf32>
    %21 = arith.select %13, %5, %20 : vector<8x128xi1>, vector<8x128xf32>
    %22 = arith.select %8, %19, %21 : vector<8x128xi1>, vector<8x128xf32>
    %23 = math.exp %22 : vector<8x128xf32>
    %cst_9 = arith.constant 0.000000e+00 : f32
    %24 = vector.broadcast %cst_9 : f32 to vector<8x128xf32>
    %25 = arith.select %8, %23, %24 : vector<8x128xi1>, vector<8x128xf32>
    %cst_10 = arith.constant dense<0.000000e+00> : vector<8xf32>
    %26 = vector.multi_reduction <add>, %25, %cst_10 [1] : vector<8x128xf32> to vector<8xf32>
    %27 = vector.shape_cast %26 : vector<8xf32> to vector<8x1xf32>
    %cst_11 = arith.constant 1.000000e+00 : f32
    %28 = vector.broadcast %cst_11 : f32 to vector<8x1xf32>
    %29 = arith.divf %28, %27 : vector<8x1xf32>
    %30 = vector.broadcast %29 : vector<8x1xf32> to vector<8x128xf32>
    %31 = arith.mulf %25, %30 : vector<8x128xf32>
    %32 = arith.select %13, %23, %5 : vector<8x128xi1>, vector<8x128xf32>
    %33 = arith.select %8, %31, %32 : vector<8x128xi1>, vector<8x128xf32>
    %c0_12 = arith.constant 0 : index
    %c0_13 = arith.constant 0 : index
    %34 = vector.load %arg4[%c0_12, %c0_13] : memref<8x128xf32, #tpu.memory_space<vmem>>, vector<8x128xf32>
    tpu.vector_store %arg4[%c0_12, %c0_13], %33 {strides = array<i32>} : memref<8x128xf32, #tpu.memory_space<vmem>>, vector<8x128xf32>,
    return
  }
  func.func @transform_0(%arg0: i32) -> (i32, i32) {
    %c0_i32 = arith.constant 0 : i32
    %c0_i32_0 = arith.constant 0 : i32
    return %arg0, %c0_i32 : i32, i32
  }
  func.func @transform_1(%arg0: i32) -> (i32, i32) {
    %c0_i32 = arith.constant 0 : i32
    %c0_i32_0 = arith.constant 0 : i32
    %c0_i32_1 = arith.constant 0 : i32
    return %c0_i32, %c0_i32_0 : i32, i32
  }
  func.func @transform_2(%arg0: i32) -> (i32, i32) {
    %c0_i32 = arith.constant 0 : i32
    %c0_i32_0 = arith.constant 0 : i32
    %c0_i32_1 = arith.constant 0 : i32
    return %c0_i32, %c0_i32_0 : i32, i32
  }
  func.func @transform_3(%arg0: i32) -> (i32, i32) {
    %c0_i32 = arith.constant 0 : i32
    %c0_i32_0 = arith.constant 0 : i32
    return %arg0, %c0_i32 : i32, i32
  }
}

</mosaic_0001>

<llo_original>
// kernel: tpu_custom_call.1
$region0: #{tpu_custom_call.1}
  #allocation0 [shape = 'u32[]', space=smem, size = 0x4, offset = 0x4, fixed_abs, tag = 'smem constant byte address 0x4 - core index']
  #allocation1 [shape = 'u32[144,128]{1,0:T(1,128)}', space=vmem, size = 0x12000, scoped, tag = 'internal scratch']
  %s0 = inlined_call_operand.hbm [shape: bf16[8,32], index: 0, kind: input, shape index: {}]
  %s1 = inlined_call_operand.hbm [shape: bf16[32,128], index: 1, kind: input, shape index: {}]
  %s2 = inlined_call_operand.vmem [shape: f32[1,128], index: 2, kind: input, shape index: {}]
  %s3 = inlined_call_operand.hbm [shape: f32[8,128], index: 3, kind: output, shape index: {}]
  %s4 = sld [smem:[#allocation0]]
  $region30: #{tpu_custom_call.1} parent=0
    _
  %s6 = ssub.s32 1, %s4
  %s7 = scalar_select 0, %s6, %s4
  $region1: #{tpu_custom_call.1} parent=0
    #allocation2 [shape = 'u8[2048]{0}', space=vmem, size = 0x800, scoped, tag = 'input window, operand 0, single buffered']
    #allocation3 [shape = 's32[1]{0}', space=sflag, size = 0x4, scoped, tag = 'scoped memory for tpu_custom_call.1']
    #allocation4 [shape = 's32[1]{0}', space=sflag, size = 0x4, scoped, tag = 'scoped memory for tpu_custom_call.1']
    #allocation5 [shape = 'u8[8192]{0}', space=vmem, size = 0x2000, scoped, tag = 'input window, operand 1, single buffered']
    #allocation6 [shape = 's32[1]{0}', space=sflag, size = 0x4, scoped, tag = 'scoped memory for tpu_custom_call.1']
    #allocation7 [shape = 'u8[4096]{0}', space=vmem, size = 0x1000, scoped, tag = 'output window, operand 0, single buffered']
    %8 = vsyncpa [#allocation3], 0
    %9 = vsyncpa [#allocation6], 0
    %10 = vsyncpa [#allocation4], 0
    // Predicated region
    $region2: #{tpu_custom_call.1} parent=1 // pred_check
      _
    $region3: #{tpu_custom_call.1} parent=1 // pred_check_branch
      %12 = sbr.rel (0) target = $region5
    $region4: #{tpu_custom_call.1} parent=1 // pred_region
      %s14 = ssub.s32 64, 64
      %15 = vsyncadd [#allocation3], %s14
      %s17 = sshll.u32 [#allocation2], 4
      %s18 = int_to_ptr.vmem [resolvable:$true] %s17
      %20 = dma.hbm_to_vmem [thread:$0]  %s0, 64, %s18, [#allocation3]
    $region5: #{tpu_custom_call.1} parent=1 // pred_fallthru
      _
    // Predicated region
    $region6: #{tpu_custom_call.1} parent=1 // pred_check
      _
    $region7: #{tpu_custom_call.1} parent=1 // pred_check_branch
      %22 = sbr.rel (0) target = $region9
    $region8: #{tpu_custom_call.1} parent=1 // pred_region
      %s24 = ssub.s32 256, 256
      %25 = vsyncadd [#allocation6], %s24
      %s26 = sshll.u32 [#allocation5], 4
      %s27 = int_to_ptr.vmem [resolvable:$true] %s26
      %32 = dma.hbm_to_vmem [thread:$0]  %s1, 256, %s27, [#allocation6], 64, 64, 4
    $region9: #{tpu_custom_call.1} parent=1 // pred_fallthru
      _
    // Predicated region
    $region10: #{tpu_custom_call.1} parent=1 // pred_check
      _
    $region11: #{tpu_custom_call.1} parent=1 // pred_check_branch
      %34 = sbr.rel (0) target = $region13
    $region12: #{tpu_custom_call.1} parent=1 // pred_region
      _
    $region13: #{tpu_custom_call.1} parent=1 // pred_fallthru
      _
    // Predicated region
    $region14: #{tpu_custom_call.1} parent=1 // pred_check
      _
    $region15: #{tpu_custom_call.1} parent=1 // pred_check_branch
      %36 = sbr.rel (0) target = $region17
    $region16: #{tpu_custom_call.1} parent=1 // pred_region
      %37 = dma.done [#allocation3], 64
    $region17: #{tpu_custom_call.1} parent=1 // pred_fallthru
      _
    // Predicated region
    $region18: #{tpu_custom_call.1} parent=1 // pred_check
      _
    $region19: #{tpu_custom_call.1} parent=1 // pred_check_branch
      %39 = sbr.rel (0) target = $region21
    $region20: #{tpu_custom_call.1} parent=1 // pred_region
      %40 = dma.done [#allocation6], 256
    $region21: #{tpu_custom_call.1} parent=1 // pred_fallthru
      _
    %v42 = vld [vmem:[#allocation2] sm:$0xf]
    %v43 = vld [vmem:[#allocation5] sm:$0xf]
    %v44 = vld [vmem:[#allocation5 + $0x4] sm:$0xf]
    %v45 = vld [vmem:[#allocation5 + $0x8] sm:$0xf]
    %v46 = vld [vmem:[#allocation5 + $0xc] sm:$0xf]
    %v47 = vld [vmem:[%s2] sm:$0x1]
    %v49 = vlaneseq
    %v50 = vshrl.u32 %v49, 7
    %v51 = vsub.s32 0, %v50
    %v52 = vrot.slane %v47, %v51
    %v58 = vunpack.c.l.b16 %v43
    %v59 = vunpack.c.l.b16 %v44
    %v60 = vunpack.c.l.b16 %v45
    %v61 = vunpack.c.l.b16 %v46
    %v62 = vpack.c.b16 %v59, %v58
    %v63 = vpack.c.b16 %v61, %v60
    %vm66 = vcmask 261120
    %v68 = vsel %vm66, %v42, 0
    %70 = vmatprep.subr.bf16.mxu0 0
    %71 = vmatpush1.bf16.msra.mxu0 %v62
    %72 = vmatprep.subr.bf16.mxu0 0
    %73 = vmatpush1.bf16.msra.mxu0 %v63
    %74 = vmatprep.subr.bf16.mxu0 0
    %75 = vmatpush1.bf16.msra.mxu0 0
    %76 = vmatprep.subr.bf16.mxu0 0
    %77 = vmatpush1.bf16.msra.mxu0 0
    %78 = vmatprep.subr.bf16.mxu0 0
    %79 = vmatpush1.bf16.msra.mxu0 0
    %80 = vmatprep.subr.bf16.mxu0 0
    %81 = vmatpush1.bf16.msra.mxu0 0
    %82 = vmatprep.subr.bf16.mxu0 0
    %83 = vmatpush1.bf16.msra.mxu0 0
    %84 = vmatprep.subr.bf16.mxu0 0
    %85 = vmatpush1.bf16.msra.mxu0 0
    %86 = vmatprep.subr.bf16.mxu0 0
    %87 = vmatpush1.bf16.msra.mxu0 0
    %88 = vmatprep.subr.bf16.mxu0 0
    %89 = vmatpush1.bf16.msra.mxu0 0
    %90 = vmatprep.subr.bf16.mxu0 0
    %91 = vmatpush1.bf16.msra.mxu0 0
    %92 = vmatprep.subr.bf16.mxu0 0
    %93 = vmatpush1.bf16.msra.mxu0 0
    %94 = vmatprep.subr.bf16.mxu0 0
    %95 = vmatpush1.bf16.msra.mxu0 0
    %96 = vmatprep.subr.bf16.mxu0 0
    %97 = vmatpush1.bf16.msra.mxu0 0
    %98 = vmatprep.subr.bf16.mxu0 0
    %99 = vmatpush1.bf16.msra.mxu0 0
    %100 = vmatprep.subr.bf16.mxu0 0
    %101 = vmatpush1.bf16.msra.mxu0 0
    %102 = vmatprep.mubr.bf16.mxu0 0
    %103 = vmatmul.mubr.bf16.gmra.mrb[0].mxu0 %v68
    %v104 = vpop.f32.mrb[0].mxu0
    %v105 = vadd.f32 %v52, %v104
    %v106 = vpop.f32.mrb[0].mxu0
    %v107 = vpop.f32.mrb[0].mxu0
    %v108 = vpop.f32.mrb[0].mxu0
    %109 = vdwg.mxu0
    %v110 = vlaneseq
    %v111 = vand.u32 %v110, 127
    %vm112 = vcmp.lt.s32.totalorder %v111, 5
    %vm113 = vcmp.ge.s32.totalorder %v111, 5
    %vm114 = vcmp.lt.s32.totalorder %v111, 25
    %vm115 = vmand %vm113, %vm114
    %v116 = vsel %vm112, %v105, -inf
    %117 = vmax.xlane.f32.xlu0 %v116
    %v118 = vpop.xlane.xlu0 %117
    %v119 = vsub.f32 %v105, %v118
    %v120 = vsel %vm115, %v105, 0.0
    %v121 = vsel %vm112, %v119, %v120
    %v122 = vmul.f32 %v121, 1.442695
    %v123 = vpow.pop %v122
    %v124 = vsel %vm112, %v123, 0.0
    %125 = vadd.xlane.f32.xlu0 %v124
    %v126 = vpop.xlane.xlu0 %125
    %v127 = vrcp.pop %v126
    %v128 = vmul.f32 1.0, %v127
    %v129 = vmul.f32 %v124, %v128
    %v130 = vsel %vm115, %v123, %v105
    %v131 = vsel %vm112, %v129, %v130
    %132 = vst [vmem:[#allocation7] sm:$0xff] %v131
    // Predicated region
    $region22: #{tpu_custom_call.1} parent=1 // pred_check
      _
    $region23: #{tpu_custom_call.1} parent=1 // pred_check_branch
      %134 = sbr.rel (0) target = $region25
    $region24: #{tpu_custom_call.1} parent=1 // pred_region
      %s136 = ssub.s32 128, 128
      %137 = vsyncadd [#allocation4], %s136
      %s139 = sshll.u32 [#allocation7], 4
      %s140 = int_to_ptr.vmem [resolvable:$true] %s139
      %142 = dma.vmem_to_hbm [thread:$0]  %s140, 128, %s3, [#allocation4]
    $region25: #{tpu_custom_call.1} parent=1 // pred_fallthru
      _
    // Predicated region
    $region26: #{tpu_custom_call.1} parent=1 // pred_check
      _
    $region27: #{tpu_custom_call.1} parent=1 // pred_check_branch
      %144 = sbr.rel (0) target = $region29
    $region28: #{tpu_custom_call.1} parent=1 // pred_region
      %145 = dma.done [#allocation4], 128
    $region29: #{tpu_custom_call.1} parent=1 // pred_fallthru
      _
    %146 = vsyncpa [#allocation3], 1
    %147 = vsyncpa [#allocation6], 1
    %148 = vsyncpa [#allocation4], 1

</llo_original>
